<compile_context>
chip_gen: v7x
topology: tpu7x:2x2x1
jax: 0.10.0
libtpu: 0.0.40
codegen_flags: <defaults>
</compile_context>

<pallas_src>
import jax
import jax.numpy as jnp
from jax.experimental import pallas as pl
from jax.experimental.pallas import tpu as pltpu


def _round_up(x: int, m: int) -> int:
    return (x + m - 1) // m * m


def _vmem_limit_bytes() -> int:
    """~96 MiB on v5e/v6e (128 MiB VMEM), ~48 MiB on v7x (64 MiB VMEM)."""
    cap = 64 * 1024 * 1024
    try:
        info = pltpu.get_tpu_info()
        cap = int(getattr(info, "vmem_capacity_bytes", cap))
    except Exception:
        pass
    return min(96 * 1024 * 1024, (cap * 3) // 4)


def _pick_tn(kp: int) -> int:
    for cand in (512, 256, 128):
        if kp % cand == 0:
            return cand
    return 128  # unreachable: kp is always a multiple of 128


def _pick_tm(m: int) -> int:
    # Single M block for realistic prefix lengths -> each input streamed once.
    return min(1024, _round_up(m, 8))


# ----------------------- const-init fast path (default) -----------------------
def _rowsum_kernel(x_ref, o_ref):
    # weight == 1.0, bias == 0.0  =>  out[p, k] = sum_h x[p, h]  (exact, f32)
    s = jnp.sum(x_ref[...], axis=-1, keepdims=True)          # (tm, 1) f32
    o_ref[...] = jnp.broadcast_to(s, o_ref.shape)


def prefix_rowsum(x2d: jax.Array, K: int) -> jax.Array:
    """x2d: (M, H) f32  ->  (M, K) f32 where every column is the row-sum."""
    M, H = x2d.shape
    tm = _pick_tm(M)
    Mp = _round_up(M, tm)
    Kp = _round_up(K, 128)
    tn = _pick_tn(Kp)
    if Mp != M:
        x2d = jnp.pad(x2d, ((0, Mp - M), (0, 0)))

    out = pl.pallas_call(
        _rowsum_kernel,
        out_shape=jax.ShapeDtypeStruct((Mp, Kp), jnp.float32),
        grid_spec=pltpu.PrefetchScalarGridSpec(
            num_scalar_prefetch=0,
            grid=(Mp // tm, Kp // tn),
            # X block index is constant across j (innermost) -> DMA'd once per i.
            in_specs=[pl.BlockSpec((tm, H), lambda i, j: (i, 0))],
            out_specs=pl.BlockSpec((tm, tn), lambda i, j: (i, j)),
        ),
        compiler_params=pltpu.CompilerParams(
            dimension_semantics=("parallel", "parallel"),
            vmem_limit_bytes=_vmem_limit_bytes(),
        ),
    )(x2d)

    if Mp != M or Kp != K:
        out = out[:M, :K]
    return out


# ------------------- general Linear path (real checkpoint W) ------------------
def _linear_kernel(x_ref, w_ref, b_ref, o_ref):
    acc = jnp.dot(x_ref[...], w_ref[...], preferred_element_type=jnp.float32)
    o_ref[...] = acc + b_ref[...]                 # (tm, tn) + (1, tn) broadcast


def prefix_linear(x2d: jax.Array, w_t: jax.Array, bias2d: jax.Array, K: int) -> jax.Array:
    """x2d: (M, H) bf16, w_t: (H, Kp) bf16 (pre-padded at init),
    bias2d: (1, Kp) f32 (pre-padded at init)  ->  (M, K) f32."""
    M, H = x2d.shape
    Kp = w_t.shape[1]
    tm = _pick_tm(M)                 # single M block where possible -> W read once
    Mp = _round_up(M, tm)
    tn = _pick_tn(Kp)                # 512 for real K (>=2 j-blocks for v7x megacore)
    if Mp != M:
        x2d = jnp.pad(x2d, ((0, Mp - M), (0, 0)))

    out = pl.pallas_call(
        _linear_kernel,
        out_shape=jax.ShapeDtypeStruct((Mp, Kp), jnp.float32),
        grid_spec=pltpu.PrefetchScalarGridSpec(
            num_scalar_prefetch=0,
            grid=(Mp // tm, Kp // tn),
            in_specs=[
                pl.BlockSpec((tm, H), lambda i, j: (i, 0)),   # X tile (resident across j)
                pl.BlockSpec((H, tn), lambda i, j: (0, j)),   # W tile
                pl.BlockSpec((1, tn), lambda i, j: (0, j)),   # bias tile (tiny DMA)
            ],
            out_specs=pl.BlockSpec((tm, tn), lambda i, j: (i, j)),
        ),
        compiler_params=pltpu.CompilerParams(
            dimension_semantics=("parallel", "parallel"),
            vmem_limit_bytes=_vmem_limit_bytes(),
        ),
    )(x2d, w_t, bias2d)

    if Mp != M or Kp != K:
        out = out[:M, :K]
    return out


# ------------------------------ PrefixEncoder (JAX) ---------------------------
class PrefixEncoderJax:
    def __init__(self, num_layers, kv_channels, multi_query_group_num,
                 hidden_size, vocab_size, prompt_ids, key,
                 linear_weight=None, linear_bias=None):
        # Embedding lookup is init-time glue (frozen), done in plain JAX.
        emb_table = jax.random.normal(key, (vocab_size, hidden_size),
                                      dtype=jnp.float32) * 0.02
        prompt_ids = jnp.asarray(prompt_ids, dtype=jnp.int32)[None, :]   # (1, P)
        self.embedded = emb_table[prompt_ids]                            # (1, P, H) f32

        kv_size = num_layers * kv_channels * multi_query_group_num * 2
        self.kv_size = kv_size
        self.hidden_size = hidden_size

        # --- all per-call prep hoisted here (review: no per-call pad/cast) ----
        self._x_f32 = self.embedded[0]                                   # (P, H) f32
        self._x_bf16 = self._x_f32.astype(jnp.bfloat16)                  # matmul path

        if linear_weight is None:
            # Module init: weight.fill_(1.0), bias.fill_(0.0)  =>  exact row-sum path.
            self._const_init = True
            self.weight_t = None
            self.bias2d = None
        else:
            self._const_init = False
            Kp = _round_up(kv_size, 128)
            w_t = jnp.asarray(linear_weight).T.astype(jnp.bfloat16)      # (H, K)
            b = (jnp.zeros((kv_size,), jnp.float32) if linear_bias is None
                 else jnp.asarray(linear_bias, jnp.float32))
            if Kp != kv_size:
                w_t = jnp.pad(w_t, ((0, 0), (0, Kp - kv_size)))
                b = jnp.pad(b, (0, Kp - kv_size))
            self.weight_t = w_t                                          # (H, Kp) bf16
            self.bias2d = b.reshape(1, Kp)                               # (1, Kp) f32

    def __call__(self, prefix: jax.Array) -> jax.Array:
        batch_size = prefix.shape[0]
        # Batch hoist: init_embedded is an exact repeat of one embedding block and
        # the Linear has no per-batch state, so compute once on (P, ·).
        if self._const_init:
            out2d = prefix_rowsum(self._x_f32, self.kv_size)             # (P, K) f32
        else:
            out2d = prefix_linear(self._x_bf16, self.weight_t,
                                  self.bias2d, self.kv_size)             # (P, K) f32
        # Lazy broadcast to (B, P, K); consumers under jit can fuse it instead of
        # materializing B x P x K x 4 bytes of redundant HBM writes.
        return jnp.broadcast_to(out2d[None], (batch_size,) + out2d.shape)


# ------------------------------------- main ------------------------------------
if __name__ == "__main__":
    key = jax.random.PRNGKey(0)
    k_emb, k_prefix, k_w, k_b = jax.random.split(key, 4)

    # Small config consistent with the module's __init__:
    num_layers = 2
    kv_channels = 4
    multi_query_group_num = 2          # kv_size = 2*4*2*2 = 32
    hidden_size = 32
    vocab_size = 64
    prefix_len = 8
    batch = 2
    kv_size = num_layers * kv_channels * multi_query_group_num * 2

    prompt_ids = list(range(prefix_len))   # deterministic prompt ids

    # prefix: (batch, prefix_len) int tokens — only its batch dim is used.
    prefix = jax.random.randint(k_prefix, (batch, prefix_len), 0, vocab_size,
                                dtype=jnp.int32)

    # ---- Path 1: the module as specced (constant-init Linear -> row-sum kernel)
    enc = PrefixEncoderJax(num_layers, kv_channels, multi_query_group_num,
                           hidden_size, vocab_size, prompt_ids, k_emb)
    out = jax.block_until_ready(enc(prefix))

    x_ref = jnp.broadcast_to(enc.embedded, (batch,) + enc.embedded.shape[1:])
    ref = x_ref @ jnp.ones((hidden_size, kv_size), jnp.float32)          # bias == 0
    assert out.shape == (batch, prefix_len, kv_size), out.shape
    assert jnp.allclose(out, ref, atol=1e-4, rtol=1e-5)

    # ---- Path 2: general matmul kernel (used when real checkpoint weights exist)
    w_real = jax.random.normal(k_w, (kv_size, hidden_size), jnp.float32) * 0.05
    b_real = jax.random.normal(k_b, (kv_size,), jnp.float32) * 0.01
    enc2 = PrefixEncoderJax(num_layers, kv_channels, multi_query_group_num,
                            hidden_size, vocab_size, prompt_ids, k_emb,
                            linear_weight=w_real, linear_bias=b_real)
    out2 = jax.block_until_ready(enc2(prefix))
    ref2 = x_ref @ w_real.T.astype(jnp.float32) + b_real
    assert out2.shape == (batch, prefix_len, kv_size), out2.shape
    assert jnp.allclose(out2, ref2, atol=5e-3, rtol=5e-3)

    print("KERNEL_OK")
</pallas_src>

<mosaic_0001>
module attributes {stable_mosaic.version = 11 : i64} {
  func.func @_rowsum_kernel(%arg0: i32, %arg1: i32, %arg2: memref<8x32xf32, #tpu.memory_space<vmem>>, %arg3: memref<8x128xf32, #tpu.memory_space<vmem>>) attributes {dimension_semantics = [#tpu.dimension_semantics<parallel>, #tpu.dimension_semantics<parallel>], iteration_bounds = array<i64: 1, 1>, scalar_prefetch = 0 : i64, scratch_operands = 0 : i64, tpu.core_type = #tpu.core_type<tc>, window_params = [{transform_indices = @transform_0, window_bounds = array<i64: 8, 32>}, {transform_indices = @transform_1, window_bounds = array<i64: 8, 128>}]} {
    %c0 = arith.constant 0 : index
    %c0_0 = arith.constant 0 : index
    %0 = vector.load %arg2[%c0, %c0_0] : memref<8x32xf32, #tpu.memory_space<vmem>>, vector<8x32xf32>
    %cst = arith.constant dense<0.000000e+00> : vector<8xf32>
    %1 = vector.multi_reduction <add>, %0, %cst [1] : vector<8x32xf32> to vector<8xf32>
    %2 = vector.shape_cast %1 : vector<8xf32> to vector<8x1xf32>
    %3 = vector.shape_cast %2 : vector<8x1xf32> to vector<8x1xf32>
    %4 = vector.broadcast %3 : vector<8x1xf32> to vector<8x128xf32>
    %c0_1 = arith.constant 0 : index
    %c0_2 = arith.constant 0 : index
    %5 = vector.load %arg3[%c0_1, %c0_2] : memref<8x128xf32, #tpu.memory_space<vmem>>, vector<8x128xf32>
    tpu.vector_store %arg3[%c0_1, %c0_2], %4 {strides = array<i32>} : memref<8x128xf32, #tpu.memory_space<vmem>>, vector<8x128xf32>,
    return
  }
  func.func @transform_0(%arg0: i32, %arg1: i32) -> (i32, i32) {
    %c0_i32 = arith.constant 0 : i32
    %c0_i32_0 = arith.constant 0 : i32
    return %arg0, %c0_i32 : i32, i32
  }
  func.func @transform_1(%arg0: i32, %arg1: i32) -> (i32, i32) {
    %c0_i32 = arith.constant 0 : i32
    return %arg0, %arg1 : i32, i32
  }
}

</mosaic_0001>

<llo_original>
// kernel: tpu_custom_call.1
$region0: #{tpu_custom_call.1}
  #allocation0 [shape = 'u32[]', space=smem, size = 0x4, offset = 0x4, fixed_abs, tag = 'smem constant byte address 0x4 - core index']
  #allocation1 [shape = 'u32[144,128]{1,0:T(1,128)}', space=vmem, size = 0x12000, scoped, tag = 'internal scratch']
  %s0 = inlined_call_operand.hbm [shape: f32[8,32], index: 0, kind: input, shape index: {}]
  %s1 = inlined_call_operand.hbm [shape: f32[8,128], index: 1, kind: output, shape index: {}]
  %s2 = sld [smem:[#allocation0]]
  $region18: #{tpu_custom_call.1} parent=0
    _
  %s4 = ssub.s32 1, %s2
  %s5 = scalar_select 0, %s4, %s2
  $region1: #{tpu_custom_call.1} parent=0
    #allocation2 [shape = 'u8[4096]{0}', space=vmem, size = 0x1000, scoped, tag = 'input window, operand 0, single buffered']
    #allocation3 [shape = 's32[1]{0}', space=sflag, size = 0x4, scoped, tag = 'scoped memory for tpu_custom_call.1']
    #allocation4 [shape = 's32[1]{0}', space=sflag, size = 0x4, scoped, tag = 'scoped memory for tpu_custom_call.1']
    #allocation5 [shape = 'u8[4096]{0}', space=vmem, size = 0x1000, scoped, tag = 'output window, operand 0, single buffered']
    %6 = vsyncpa [#allocation3], 0
    %7 = vsyncpa [#allocation4], 0
    // Predicated region
    $region2: #{tpu_custom_call.1} parent=1 // pred_check
      _
    $region3: #{tpu_custom_call.1} parent=1 // pred_check_branch
      %9 = sbr.rel (0) target = $region5
    $region4: #{tpu_custom_call.1} parent=1 // pred_region
      %s11 = ssub.s32 128, 128
      %12 = vsyncadd [#allocation3], %s11
      %s14 = sshll.u32 [#allocation2], 4
      %s15 = int_to_ptr.vmem [resolvable:$true] %s14
      %17 = dma.hbm_to_vmem [thread:$0]  %s0, 128, %s15, [#allocation3]
    $region5: #{tpu_custom_call.1} parent=1 // pred_fallthru
      _
    // Predicated region
    $region6: #{tpu_custom_call.1} parent=1 // pred_check
      _
    $region7: #{tpu_custom_call.1} parent=1 // pred_check_branch
      %19 = sbr.rel (0) target = $region9
    $region8: #{tpu_custom_call.1} parent=1 // pred_region
      %20 = dma.done [#allocation3], 128
    $region9: #{tpu_custom_call.1} parent=1 // pred_fallthru
      _
    %v21 = vld [vmem:[#allocation2] sm:$0xff]
    %vm22 = vcmask 261120
    %v23 = vsel %vm22, %v21, 0.0
    %24 = vadd.xlane.f32.xlu0 %v23
    %v25 = vpop.xlane.xlu0 %24
    %26 = vst [vmem:[#allocation5] sm:$0xff] %v25
    // Predicated region
    $region10: #{tpu_custom_call.1} parent=1 // pred_check
      _
    $region11: #{tpu_custom_call.1} parent=1 // pred_check_branch
      %28 = sbr.rel (0) target = $region13
    $region12: #{tpu_custom_call.1} parent=1 // pred_region
      %s30 = ssub.s32 128, 128
      %31 = vsyncadd [#allocation4], %s30
      %s33 = sshll.u32 [#allocation5], 4
      %s34 = int_to_ptr.vmem [resolvable:$true] %s33
      %36 = dma.vmem_to_hbm [thread:$0]  %s34, 128, %s1, [#allocation4]
    $region13: #{tpu_custom_call.1} parent=1 // pred_fallthru
      _
    // Predicated region
    $region14: #{tpu_custom_call.1} parent=1 // pred_check
      _
    $region15: #{tpu_custom_call.1} parent=1 // pred_check_branch
      %38 = sbr.rel (0) target = $region17
    $region16: #{tpu_custom_call.1} parent=1 // pred_region
      %39 = dma.done [#allocation4], 128
    $region17: #{tpu_custom_call.1} parent=1 // pred_fallthru
      _
    %40 = vsyncpa [#allocation3], 1
    %41 = vsyncpa [#allocation4], 1

</llo_original>
